<compile_context>
chip_gen: v7x
topology: tpu7x:2x2x1
jax: 0.10.0
libtpu: 0.0.40
codegen_flags: <defaults>
</compile_context>

<pallas_src>
import functools

import jax
import jax.numpy as jnp
from jax.experimental import pallas as pl
from jax.experimental.pallas import tpu as pltpu


# ----------------------------- Pallas kernel ------------------------------ #

def _gnn_fused_kernel(a_ref, x_ref, w_ref, shift_ref, o_ref, *, num_layers):
    """All SAGE layers fused into one kernel invocation.

    a_ref:     (N, N)       row-normalized adjacency (mean aggregation)
    x_ref:     (N, H)       input node features
    w_ref:     (L, 2H, H)   per-layer [lin_l.weight^T ; lin_r.weight^T] * bn_scale
    shift_ref: (L, 1, H)    per-layer lin_l.bias * bn_scale + bn_shift
    o_ref:     (N, H)       output node features
    """
    a = a_ref[...]
    x = x_ref[...]
    for layer in range(num_layers):  # static unroll; L is small and static
        # mean neighbor aggregation == A_hat @ x   (MXU)
        agg = jnp.dot(a, x, preferred_element_type=jnp.float32)
        # [agg | x] @ [W_l'; W_r'] == agg @ W_l' + x @ W_r'  (single MXU matmul)
        xa = jnp.concatenate([agg, x], axis=-1)              # (N, 2H), lane concat
        out = (jnp.dot(xa, w_ref[layer], preferred_element_type=jnp.float32)
               + shift_ref[layer])                           # bias + BN affine (folded)
        if layer < num_layers - 1:
            out = jnp.maximum(out, 0.0)      # ReLU (dropout = identity in eval)
        x = out
    o_ref[...] = x.astype(o_ref.dtype)


def gnn_forward_fused(a_hat, x, w_folded, shift_folded):
    """Single fused pallas_call over all layers (small-graph path: everything
    resident in VMEM, whole-array blocks, one grid step)."""
    n, h = x.shape
    num_layers = w_folded.shape[0]
    kernel = functools.partial(_gnn_fused_kernel, num_layers=num_layers)

    def full_spec(shape):
        zeros = (0,) * len(shape)
        return pl.BlockSpec(shape, lambda i, _z=zeros: _z)

    # Advisory cost hint so XLA schedules the surrounding glue sensibly.
    flops = num_layers * (2 * n * n * h + 2 * n * (2 * h) * h)
    bytes_accessed = 4 * (n * n + 2 * n * h
                          + num_layers * (2 * h * h + h))

    return pl.pallas_call(
        kernel,
        out_shape=jax.ShapeDtypeStruct((n, h), jnp.float32),
        grid=(1,),
        in_specs=[
            full_spec((n, n)),                     # A_hat
            full_spec((n, h)),                     # x
            full_spec((num_layers, 2 * h, h)),     # folded stacked [W_l^T ; W_r^T]
            full_spec((num_layers, 1, h)),         # folded shift
        ],
        out_specs=full_spec((n, h)),
        compiler_params=pltpu.CompilerParams(
            dimension_semantics=("arbitrary",)),
        cost_estimate=pl.CostEstimate(
            flops=flops, transcendentals=0, bytes_accessed=bytes_accessed),
    )(a_hat, x, w_folded, shift_folded)


# ------------------------------ JAX glue ---------------------------------- #

def build_mean_adj(edge_index, num_nodes):
    """Dense row-normalized adjacency: A_hat[i, j] = 1/deg_in(i) per edge j->i.

    Duplicate edges are counted in both numerator and denominator, matching
    PyG scatter-mean aggregation.  Isolated nodes aggregate to 0.
    """
    src = edge_index[0]
    dst = edge_index[1]
    a = jnp.zeros((num_nodes, num_nodes), jnp.float32)
    a = a.at[dst, src].add(1.0)
    deg = a.sum(axis=1, keepdims=True)
    deg = jnp.where(deg > 0, deg, 1.0)
    return a / deg


def init_gnn_params(key, hidden_channels=128, num_layers=3):
    params = {"convs": [], "bns": []}
    for layer in range(num_layers):
        key, k1, k2, k3 = jax.random.split(key, 4)
        scale = 1.0 / jnp.sqrt(jnp.float32(hidden_channels))
        conv = {
            "w_l": jax.random.uniform(k1, (hidden_channels, hidden_channels),
                                      jnp.float32, -scale, scale),
            "b_l": jax.random.uniform(k2, (hidden_channels,),
                                      jnp.float32, -scale, scale),
            "w_r": jax.random.uniform(k3, (hidden_channels, hidden_channels),
                                      jnp.float32, -scale, scale),
        }
        params["convs"].append(conv)
        if layer < num_layers - 1:
            key, k4, k5, k6, k7 = jax.random.split(key, 5)
            bn = {
                "gamma": 1.0 + 0.1 * jax.random.normal(k4, (hidden_channels,), jnp.float32),
                "beta": 0.1 * jax.random.normal(k5, (hidden_channels,), jnp.float32),
                "running_mean": 0.1 * jax.random.normal(k6, (hidden_channels,), jnp.float32),
                "running_var": 1.0 + 0.1 * jax.random.uniform(k7, (hidden_channels,), jnp.float32),
            }
            params["bns"].append(bn)
    return params


def fold_gnn_params(params, eps=1e-5):
    """One-time prep: transpose weights, fold BN (eval) + lin_l bias, and stack
    [W_l'; W_r'] so each layer needs a single (2H, H) projection matmul.

    Returns stacked (L, 2H, H) weights and (L, 1, H) shifts.
    """
    num_layers = len(params["convs"])
    h = params["convs"][0]["w_l"].shape[0]
    w_list, shift_list = [], []
    for i, conv in enumerate(params["convs"]):
        if i < num_layers - 1:
            bn = params["bns"][i]
            scale = bn["gamma"] / jnp.sqrt(bn["running_var"] + eps)
            shift = bn["beta"] - bn["running_mean"] * scale
        else:
            scale = jnp.ones((h,), jnp.float32)
            shift = jnp.zeros((h,), jnp.float32)
        wl = jnp.transpose(conv["w_l"]) * scale[None, :]    # (H, H)
        wr = jnp.transpose(conv["w_r"]) * scale[None, :]    # (H, H)
        w_list.append(jnp.concatenate([wl, wr], axis=0))    # (2H, H): [agg-rows ; x-rows]
        shift_list.append((conv["b_l"] * scale + shift).reshape(1, h))
    return jnp.stack(w_list), jnp.stack(shift_list)


def gnn_reference(x, a_hat, params, eps=1e-5):
    """Pure-JAX reference of the eval-mode PyTorch forward (for verification)."""
    num_layers = len(params["convs"])
    for i, conv in enumerate(params["convs"]):
        agg = a_hat @ x
        y = agg @ conv["w_l"].T + conv["b_l"] + x @ conv["w_r"].T
        if i < num_layers - 1:
            bn = params["bns"][i]
            scale = bn["gamma"] / jnp.sqrt(bn["running_var"] + eps)
            y = (y - bn["running_mean"]) * scale + bn["beta"]
            y = jnp.maximum(y, 0.0)
        x = y
    return x


# ------------------------------- main -------------------------------------- #

if __name__ == "__main__":
    NUM_NODES = 16     # multiple of 8 (sublanes)
    HIDDEN = 128       # lane-dense: multiple of 128 lanes
    NUM_EDGES = 64
    NUM_LAYERS = 3

    key = jax.random.PRNGKey(0)
    key, kx, ke_src, ke_dst, kp = jax.random.split(key, 5)

    x = jax.random.normal(kx, (NUM_NODES, HIDDEN), jnp.float32)
    edge_index = jnp.stack([
        jax.random.randint(ke_src, (NUM_EDGES,), 0, NUM_NODES),
        jax.random.randint(ke_dst, (NUM_EDGES,), 0, NUM_NODES),
    ], axis=0).astype(jnp.int32)

    params = init_gnn_params(kp, hidden_channels=HIDDEN, num_layers=NUM_LAYERS)

    # One-time glue (hoisted out of the per-forward path).
    a_hat = build_mean_adj(edge_index, NUM_NODES)
    w_f, shift_f = fold_gnn_params(params)

    fwd = jax.jit(gnn_forward_fused)
    out = jax.block_until_ready(fwd(a_hat, x, w_f, shift_f))

    assert out.shape == (NUM_NODES, HIDDEN)
    assert bool(jnp.all(jnp.isfinite(out)))

    # Loose tolerance: MXU f32 matmuls use bf16 passes at default precision.
    ref = gnn_reference(x, a_hat, params)
    rel_err = float(jnp.max(jnp.abs(out - ref)) / (jnp.max(jnp.abs(ref)) + 1e-6))
    assert rel_err < 5e-2, f"relative error too large: {rel_err}"

    print("KERNEL_OK")
</pallas_src>

<mosaic_0001>
module attributes {stable_mosaic.version = 11 : i64} {
  func.func @_gnn_fused_kernel(%arg0: i32, %arg1: memref<16x16xf32, #tpu.memory_space<vmem>>, %arg2: memref<16x128xf32, #tpu.memory_space<vmem>>, %arg3: memref<3x256x128xf32, #tpu.memory_space<vmem>>, %arg4: memref<3x1x128xf32, #tpu.memory_space<vmem>>, %arg5: memref<16x128xf32, #tpu.memory_space<vmem>>) attributes {dimension_semantics = [#tpu.dimension_semantics<arbitrary>], iteration_bounds = array<i64: 1>, scalar_prefetch = 0 : i64, scratch_operands = 0 : i64, tpu.core_type = #tpu.core_type<tc>, window_params = [{pipeline_mode = #tpu.pipeline_mode<synchronous>, transform_indices = @transform_0, window_bounds = array<i64: 16, 16>}, {pipeline_mode = #tpu.pipeline_mode<synchronous>, transform_indices = @transform_1, window_bounds = array<i64: 16, 128>}, {pipeline_mode = #tpu.pipeline_mode<synchronous>, transform_indices = @transform_2, window_bounds = array<i64: 3, 256, 128>}, {pipeline_mode = #tpu.pipeline_mode<synchronous>, transform_indices = @transform_3, window_bounds = array<i64: 3, 1, 128>}, {pipeline_mode = #tpu.pipeline_mode<synchronous>, transform_indices = @transform_4, window_bounds = array<i64: 16, 128>}]} {
    %c0 = arith.constant 0 : index
    %c0_0 = arith.constant 0 : index
    %0 = vector.load %arg1[%c0, %c0_0] : memref<16x16xf32, #tpu.memory_space<vmem>>, vector<16x16xf32>
    %c0_1 = arith.constant 0 : index
    %c0_2 = arith.constant 0 : index
    %1 = vector.load %arg2[%c0_1, %c0_2] : memref<16x128xf32, #tpu.memory_space<vmem>>, vector<16x128xf32>
    %cst = arith.constant dense<0.000000e+00> : vector<16x128xf32>
    %2 = tpu.matmul %0, %1, %cst {dimension_numbers = #tpu.dot_dimension_numbers<[1], [0], [0], [1], [0, 0, 1, 1], [], []>} : vector<16x16xf32>, vector<16x128xf32>, vector<16x128xf32> -> vector<16x128xf32>
    %3 = tpu.concatenate %2, %1 in 1 : vector<16x128xf32>, vector<16x128xf32> -> vector<16x256xf32>
    %c0_3 = arith.constant 0 : index
    %c0_4 = arith.constant 0 : index
    %c0_5 = arith.constant 0 : index
    %4 = vector.load %arg3[%c0_3, %c0_4, %c0_5] : memref<3x256x128xf32, #tpu.memory_space<vmem>>, vector<1x256x128xf32>
    %5 = vector.shape_cast %4 : vector<1x256x128xf32> to vector<256x128xf32>
    %cst_6 = arith.constant dense<0.000000e+00> : vector<16x128xf32>
    %6 = tpu.matmul %3, %5, %cst_6 {dimension_numbers = #tpu.dot_dimension_numbers<[1], [0], [0], [1], [0, 0, 1, 1], [], []>} : vector<16x256xf32>, vector<256x128xf32>, vector<16x128xf32> -> vector<16x128xf32>
    %c0_7 = arith.constant 0 : index
    %c0_8 = arith.constant 0 : index
    %c0_9 = arith.constant 0 : index
    %7 = vector.load %arg4[%c0_7, %c0_8, %c0_9] : memref<3x1x128xf32, #tpu.memory_space<vmem>>, vector<1x1x128xf32>
    %8 = vector.shape_cast %7 : vector<1x1x128xf32> to vector<1x128xf32>
    %9 = vector.broadcast %8 : vector<1x128xf32> to vector<16x128xf32>
    %10 = arith.addf %6, %9 : vector<16x128xf32>
    %cst_10 = arith.constant 0.000000e+00 : f32
    %11 = vector.broadcast %cst_10 : f32 to vector<16x128xf32>
    %12 = arith.maximumf %10, %11 : vector<16x128xf32>
    %cst_11 = arith.constant dense<0.000000e+00> : vector<16x128xf32>
    %13 = tpu.matmul %0, %12, %cst_11 {dimension_numbers = #tpu.dot_dimension_numbers<[1], [0], [0], [1], [0, 0, 1, 1], [], []>} : vector<16x16xf32>, vector<16x128xf32>, vector<16x128xf32> -> vector<16x128xf32>
    %14 = tpu.concatenate %13, %12 in 1 : vector<16x128xf32>, vector<16x128xf32> -> vector<16x256xf32>
    %c1 = arith.constant 1 : index
    %c0_12 = arith.constant 0 : index
    %c0_13 = arith.constant 0 : index
    %15 = vector.load %arg3[%c1, %c0_12, %c0_13] : memref<3x256x128xf32, #tpu.memory_space<vmem>>, vector<1x256x128xf32>
    %16 = vector.shape_cast %15 : vector<1x256x128xf32> to vector<256x128xf32>
    %cst_14 = arith.constant dense<0.000000e+00> : vector<16x128xf32>
    %17 = tpu.matmul %14, %16, %cst_14 {dimension_numbers = #tpu.dot_dimension_numbers<[1], [0], [0], [1], [0, 0, 1, 1], [], []>} : vector<16x256xf32>, vector<256x128xf32>, vector<16x128xf32> -> vector<16x128xf32>
    %c1_15 = arith.constant 1 : index
    %c0_16 = arith.constant 0 : index
    %c0_17 = arith.constant 0 : index
    %18 = vector.load %arg4[%c1_15, %c0_16, %c0_17] : memref<3x1x128xf32, #tpu.memory_space<vmem>>, vector<1x1x128xf32>
    %19 = vector.shape_cast %18 : vector<1x1x128xf32> to vector<1x128xf32>
    %20 = vector.broadcast %19 : vector<1x128xf32> to vector<16x128xf32>
    %21 = arith.addf %17, %20 : vector<16x128xf32>
    %cst_18 = arith.constant 0.000000e+00 : f32
    %22 = vector.broadcast %cst_18 : f32 to vector<16x128xf32>
    %23 = arith.maximumf %21, %22 : vector<16x128xf32>
    %cst_19 = arith.constant dense<0.000000e+00> : vector<16x128xf32>
    %24 = tpu.matmul %0, %23, %cst_19 {dimension_numbers = #tpu.dot_dimension_numbers<[1], [0], [0], [1], [0, 0, 1, 1], [], []>} : vector<16x16xf32>, vector<16x128xf32>, vector<16x128xf32> -> vector<16x128xf32>
    %25 = tpu.concatenate %24, %23 in 1 : vector<16x128xf32>, vector<16x128xf32> -> vector<16x256xf32>
    %c2 = arith.constant 2 : index
    %c0_20 = arith.constant 0 : index
    %c0_21 = arith.constant 0 : index
    %26 = vector.load %arg3[%c2, %c0_20, %c0_21] : memref<3x256x128xf32, #tpu.memory_space<vmem>>, vector<1x256x128xf32>
    %27 = vector.shape_cast %26 : vector<1x256x128xf32> to vector<256x128xf32>
    %cst_22 = arith.constant dense<0.000000e+00> : vector<16x128xf32>
    %28 = tpu.matmul %25, %27, %cst_22 {dimension_numbers = #tpu.dot_dimension_numbers<[1], [0], [0], [1], [0, 0, 1, 1], [], []>} : vector<16x256xf32>, vector<256x128xf32>, vector<16x128xf32> -> vector<16x128xf32>
    %c2_23 = arith.constant 2 : index
    %c0_24 = arith.constant 0 : index
    %c0_25 = arith.constant 0 : index
    %29 = vector.load %arg4[%c2_23, %c0_24, %c0_25] : memref<3x1x128xf32, #tpu.memory_space<vmem>>, vector<1x1x128xf32>
    %30 = vector.shape_cast %29 : vector<1x1x128xf32> to vector<1x128xf32>
    %31 = vector.broadcast %30 : vector<1x128xf32> to vector<16x128xf32>
    %32 = arith.addf %28, %31 : vector<16x128xf32>
    %c0_26 = arith.constant 0 : index
    %c0_27 = arith.constant 0 : index
    %33 = vector.load %arg5[%c0_26, %c0_27] : memref<16x128xf32, #tpu.memory_space<vmem>>, vector<16x128xf32>
    tpu.vector_store %arg5[%c0_26, %c0_27], %32 {strides = array<i32>} : memref<16x128xf32, #tpu.memory_space<vmem>>, vector<16x128xf32>,
    return
  }
  func.func @transform_0(%arg0: i32) -> (i32, i32) {
    %c0_i32 = arith.constant 0 : i32
    %c0_i32_0 = arith.constant 0 : i32
    %c0_i32_1 = arith.constant 0 : i32
    return %c0_i32, %c0_i32_0 : i32, i32
  }
  func.func @transform_1(%arg0: i32) -> (i32, i32) {
    %c0_i32 = arith.constant 0 : i32
    %c0_i32_0 = arith.constant 0 : i32
    %c0_i32_1 = arith.constant 0 : i32
    return %c0_i32, %c0_i32_0 : i32, i32
  }
  func.func @transform_2(%arg0: i32) -> (i32, i32, i32) {
    %c0_i32 = arith.constant 0 : i32
    %c0_i32_0 = arith.constant 0 : i32
    %c0_i32_1 = arith.constant 0 : i32
    %c0_i32_2 = arith.constant 0 : i32
    return %c0_i32, %c0_i32_0, %c0_i32_1 : i32, i32, i32
  }
  func.func @transform_3(%arg0: i32) -> (i32, i32, i32) {
    %c0_i32 = arith.constant 0 : i32
    %c0_i32_0 = arith.constant 0 : i32
    %c0_i32_1 = arith.constant 0 : i32
    %c0_i32_2 = arith.constant 0 : i32
    return %c0_i32, %c0_i32_0, %c0_i32_1 : i32, i32, i32
  }
  func.func @transform_4(%arg0: i32) -> (i32, i32) {
    %c0_i32 = arith.constant 0 : i32
    %c0_i32_0 = arith.constant 0 : i32
    %c0_i32_1 = arith.constant 0 : i32
    return %c0_i32, %c0_i32_0 : i32, i32
  }
}

</mosaic_0001>

<llo_original>
// kernel: gnn_forward_fused.1
$region0: #{gnn_forward_fused.1}
  #allocation0 [shape = 'u32[]', space=smem, size = 0x4, offset = 0x4, fixed_abs, tag = 'smem constant byte address 0x4 - core index']
  #allocation1 [shape = 'u32[144,128]{1,0:T(1,128)}', space=vmem, size = 0x12000, scoped, tag = 'internal scratch']
  %s0 = inlined_call_operand.hbm [shape: f32[16,16], index: 0, kind: input, shape index: {}]
  %s1 = inlined_call_operand.hbm [shape: f32[16,128], index: 1, kind: input, shape index: {}]
  %s2 = inlined_call_operand.hbm [shape: f32[3,256,128], index: 2, kind: input, shape index: {}]
  %s3 = inlined_call_operand.vmem [shape: f32[3,1,128], index: 3, kind: input, shape index: {}]
  %s4 = inlined_call_operand.hbm [shape: f32[16,128], index: 4, kind: output, shape index: {}]
  %s5 = sld [smem:[#allocation0]]
  $region38: #{gnn_forward_fused.1} parent=0
    _
  %s7 = ssub.s32 1, %s5
  %s8 = scalar_select 0, %s7, %s5
  $region1: #{gnn_forward_fused.1} parent=0
    #allocation2 [shape = 'u8[8192]{0}', space=vmem, size = 0x2000, scoped, tag = 'input window, operand 0, single buffered']
    #allocation3 [shape = 's32[1]{0}', space=sflag, size = 0x4, scoped, tag = 'scoped memory for gnn_forward_fused.1']
    #allocation4 [shape = 's32[1]{0}', space=sflag, size = 0x4, scoped, tag = 'scoped memory for gnn_forward_fused.1']
    #allocation5 [shape = 'u8[8192]{0}', space=vmem, size = 0x2000, scoped, tag = 'input window, operand 1, single buffered']
    #allocation6 [shape = 's32[1]{0}', space=sflag, size = 0x4, scoped, tag = 'scoped memory for gnn_forward_fused.1']
    #allocation7 [shape = 'u8[393216]{0}', space=vmem, size = 0x60000, scoped, tag = 'input window, operand 2, single buffered']
    #allocation8 [shape = 'u8[8192]{0}', space=vmem, size = 0x2000, scoped, tag = 'output window, operand 0, single buffered']
    %9 = vsyncpa [#allocation3], 0
    %10 = vsyncpa [#allocation6], 0
    %11 = vsyncpa [#allocation4], 0
    // Predicated region
    $region2: #{gnn_forward_fused.1} parent=1 // pred_check
      _
    $region3: #{gnn_forward_fused.1} parent=1 // pred_check_branch
      %13 = sbr.rel (0) target = $region5
    $region4: #{gnn_forward_fused.1} parent=1 // pred_region
      %s15 = ssub.s32 256, 256
      %16 = vsyncadd [#allocation3], %s15
      %s17 = sshll.u32 [#allocation2], 4
      %s18 = int_to_ptr.vmem [resolvable:$true] %s17
      %23 = dma.hbm_to_vmem [thread:$0]  %s0, 256, %s18, [#allocation3], 128, 128, 8
    $region5: #{gnn_forward_fused.1} parent=1 // pred_fallthru
      _
    // Predicated region
    $region6: #{gnn_forward_fused.1} parent=1 // pred_check
      _
    $region7: #{gnn_forward_fused.1} parent=1 // pred_check_branch
      %25 = sbr.rel (0) target = $region9
    $region8: #{gnn_forward_fused.1} parent=1 // pred_region
      %s27 = ssub.s32 256, 256
      %28 = vsyncadd [#allocation6], %s27
      %s29 = sshll.u32 [#allocation5], 4
      %s30 = int_to_ptr.vmem [resolvable:$true] %s29
      %35 = dma.hbm_to_vmem [thread:$0]  %s1, 256, %s30, [#allocation6], 128, 128, 8
    $region9: #{gnn_forward_fused.1} parent=1 // pred_fallthru
      _
    // Predicated region
    $region10: #{gnn_forward_fused.1} parent=1 // pred_check
      _
    $region11: #{gnn_forward_fused.1} parent=1 // pred_check_branch
      %37 = sbr.rel (0) target = $region13
    $region12: #{gnn_forward_fused.1} parent=1 // pred_region
      %s39 = ssub.s32 12288, 12288
      %40 = vsyncadd [#allocation6], %s39
      %s41 = sshll.u32 [#allocation7], 4
      %s42 = int_to_ptr.vmem [resolvable:$true] %s41
      %47 = dma.hbm_to_vmem [thread:$0]  %s2, 12288, %s42, [#allocation6], 128, 128, 8
    $region13: #{gnn_forward_fused.1} parent=1 // pred_fallthru
      _
    // Predicated region
    $region14: #{gnn_forward_fused.1} parent=1 // pred_check
      _
    $region15: #{gnn_forward_fused.1} parent=1 // pred_check_branch
      %49 = sbr.rel (0) target = $region17
    $region16: #{gnn_forward_fused.1} parent=1 // pred_region
      _
    $region17: #{gnn_forward_fused.1} parent=1 // pred_fallthru
      _
    // Predicated region
    $region18: #{gnn_forward_fused.1} parent=1 // pred_check
      _
    $region19: #{gnn_forward_fused.1} parent=1 // pred_check_branch
      %51 = sbr.rel (0) target = $region21
    $region20: #{gnn_forward_fused.1} parent=1 // pred_region
      %52 = dma.done [#allocation3], 256
    $region21: #{gnn_forward_fused.1} parent=1 // pred_fallthru
      _
    // Predicated region
    $region22: #{gnn_forward_fused.1} parent=1 // pred_check
      _
    $region23: #{gnn_forward_fused.1} parent=1 // pred_check_branch
      %54 = sbr.rel (0) target = $region25
    $region24: #{gnn_forward_fused.1} parent=1 // pred_region
      %55 = dma.done [#allocation6], 256
    $region25: #{gnn_forward_fused.1} parent=1 // pred_fallthru
      _
    // Predicated region
    $region26: #{gnn_forward_fused.1} parent=1 // pred_check
      _
    $region27: #{gnn_forward_fused.1} parent=1 // pred_check_branch
      %57 = sbr.rel (0) target = $region29
    $region28: #{gnn_forward_fused.1} parent=1 // pred_region
      %58 = dma.done [#allocation6], 12288
    $region29: #{gnn_forward_fused.1} parent=1 // pred_fallthru
      _
    %v59 = vld [vmem:[#allocation2] sm:$0xff]
    %v60 = vld [vmem:[#allocation2 + $0x8] sm:$0xff]
    %v61 = vld [vmem:[#allocation5] sm:$0xff]
    %v62 = vld [vmem:[#allocation5 + $0x8] sm:$0xff]
    %vm63 = vcmask 130048
    %v65 = vsel %vm63, %v59, 0
    %v68 = vsel %vm63, %v60, 0
    %70 = vmatprep.subr.mxu0 0.0
    %71 = vmatpush1.msra.mxu0 %v61
    %72 = vmatprep.subr.mxu0 0.0
    %73 = vmatpush1.msra.mxu0 %v62
    %74 = vmatprep.subr.mxu0 0.0
    %75 = vmatpush1.msra.mxu0 0.0
    %76 = vmatprep.subr.mxu0 0.0
    %77 = vmatpush1.msra.mxu0 0.0
    %78 = vmatprep.subr.mxu0 0.0
    %79 = vmatpush1.msra.mxu0 0.0
    %80 = vmatprep.subr.mxu0 0.0
    %81 = vmatpush1.msra.mxu0 0.0
    %82 = vmatprep.subr.mxu0 0.0
    %83 = vmatpush1.msra.mxu0 0.0
    %84 = vmatprep.subr.mxu0 0.0
    %85 = vmatpush1.msra.mxu0 0.0
    %86 = vmatprep.subr.mxu0 0.0
    %87 = vmatpush1.msra.mxu0 0.0
    %88 = vmatprep.subr.mxu0 0.0
    %89 = vmatpush1.msra.mxu0 0.0
    %90 = vmatprep.subr.mxu0 0.0
    %91 = vmatpush1.msra.mxu0 0.0
    %92 = vmatprep.subr.mxu0 0.0
    %93 = vmatpush1.msra.mxu0 0.0
    %94 = vmatprep.subr.mxu0 0.0
    %95 = vmatpush1.msra.mxu0 0.0
    %96 = vmatprep.subr.mxu0 0.0
    %97 = vmatpush1.msra.mxu0 0.0
    %98 = vmatprep.subr.mxu0 0.0
    %99 = vmatpush1.msra.mxu0 0.0
    %100 = vmatprep.subr.mxu0 0.0
    %101 = vmatpush1.msra.mxu0 0.0
    %102 = vmatprep.subr.mxu0 0.0
    %103 = vmatpush1.msra.mxu0 0.0
    %104 = vmatprep.subr.mxu0 0.0
    %105 = vmatpush1.msra.mxu0 0.0
    %106 = vmatprep.subr.mxu0 0.0
    %107 = vmatpush1.msra.mxu0 0.0
    %108 = vmatprep.subr.mxu0 0.0
    %109 = vmatpush1.msra.mxu0 0.0
    %110 = vmatprep.subr.mxu0 0.0
    %111 = vmatpush1.msra.mxu0 0.0
    %112 = vmatprep.subr.mxu0 0.0
    %113 = vmatpush1.msra.mxu0 0.0
    %114 = vmatprep.subr.mxu0 0.0
    %115 = vmatpush1.msra.mxu0 0.0
    %116 = vmatprep.subr.mxu0 0.0
    %117 = vmatpush1.msra.mxu0 0.0
    %118 = vmatprep.subr.mxu0 0.0
    %119 = vmatpush1.msra.mxu0 0.0
    %120 = vmatprep.subr.mxu0 0.0
    %121 = vmatpush1.msra.mxu0 0.0
    %122 = vmatprep.subr.mxu0 0.0
    %123 = vmatpush1.msra.mxu0 0.0
    %124 = vmatprep.subr.mxu0 0.0
    %125 = vmatpush1.msra.mxu0 0.0
    %126 = vmatprep.subr.mxu0 0.0
    %127 = vmatpush1.msra.mxu0 0.0
    %128 = vmatprep.subr.mxu0 0.0
    %129 = vmatpush1.msra.mxu0 0.0
    %130 = vmatprep.subr.mxu0 0.0
    %131 = vmatpush1.msra.mxu0 0.0
    %132 = vmatprep.subr.mxu0 0.0
    %133 = vmatpush1.msra.mxu0 0.0
    %134 = vmatprep.mubr.f32.mxu0 0.0
    %135 = vmatmul.mubr.f32.gmra.mrb[0].mxu0 %v65
    %v136 = vpop.f32.mrb[0].mxu0
    %v137 = vadd.f32 0.0, %v136
    %v138 = vpop.f32.mrb[0].mxu0
    %139 = vmatprep.mubr.f32.mxu0 0.0
    %140 = vmatmul.mubr.f32.gmra.mrb[0].mxu0 %v68
    %v141 = vpop.f32.mrb[0].mxu0
    %v142 = vadd.f32 0.0, %v141
    %v143 = vpop.f32.mrb[0].mxu0
    %144 = vdwg.mxu0
    %v145 = vld [vmem:[#allocation7] sm:$0xff]
    %v146 = vld [vmem:[#allocation7 + $0x8] sm:$0xff]
    %v147 = vld [vmem:[#allocation7 + $0x10] sm:$0xff]
    %v148 = vld [vmem:[#allocation7 + $0x18] sm:$0xff]
    %v149 = vld [vmem:[#allocation7 + $0x20] sm:$0xff]
    %v150 = vld [vmem:[#allocation7 + $0x28] sm:$0xff]
    %v151 = vld [vmem:[#allocation7 + $0x30] sm:$0xff]
    %v152 = vld [vmem:[#allocation7 + $0x38] sm:$0xff]
    %v153 = vld [vmem:[#allocation7 + $0x40] sm:$0xff]
    %v154 = vld [vmem:[#allocation7 + $0x48] sm:$0xff]
    %v155 = vld [vmem:[#allocation7 + $0x50] sm:$0xff]
    %v156 = vld [vmem:[#allocation7 + $0x58] sm:$0xff]
    %v157 = vld [vmem:[#allocation7 + $0x60] sm:$0xff]
    %v158 = vld [vmem:[#allocation7 + $0x68] sm:$0xff]
    %v159 = vld [vmem:[#allocation7 + $0x70] sm:$0xff]
    %v160 = vld [vmem:[#allocation7 + $0x78] sm:$0xff]
    %v161 = vld [vmem:[#allocation7 + $0x80] sm:$0xff]
    %v162 = vld [vmem:[#allocation7 + $0x88] sm:$0xff]
    %v163 = vld [vmem:[#allocation7 + $0x90] sm:$0xff]
    %v164 = vld [vmem:[#allocation7 + $0x98] sm:$0xff]
    %v165 = vld [vmem:[#allocation7 + $0xa0] sm:$0xff]
    %v166 = vld [vmem:[#allocation7 + $0xa8] sm:$0xff]
    %v167 = vld [vmem:[#allocation7 + $0xb0] sm:$0xff]
    %v168 = vld [vmem:[#allocation7 + $0xb8] sm:$0xff]
    %v169 = vld [vmem:[#allocation7 + $0xc0] sm:$0xff]
    %v170 = vld [vmem:[#allocation7 + $0xc8] sm:$0xff]
    %v171 = vld [vmem:[#allocation7 + $0xd0] sm:$0xff]
    %v172 = vld [vmem:[#allocation7 + $0xd8] sm:$0xff]
    %v173 = vld [vmem:[#allocation7 + $0xe0] sm:$0xff]
    %v174 = vld [vmem:[#allocation7 + $0xe8] sm:$0xff]
    %v175 = vld [vmem:[#allocation7 + $0xf0] sm:$0xff]
    %v176 = vld [vmem:[#allocation7 + $0xf8] sm:$0xff]
    %v177 = vld [vmem:[%s3] sm:$0x1]
    %v179 = vlaneseq
    %v180 = vshrl.u32 %v179, 7
    %v181 = vsub.s32 0, %v180
    %v182 = vrot.slane %v177, %v181
    %184 = vmatprep.subr.mxu0 0.0
    %185 = vmatpush1.msra.mxu0 %v145
    %186 = vmatprep.subr.mxu0 0.0
    %187 = vmatpush1.msra.mxu0 %v146
    %188 = vmatprep.subr.mxu0 0.0
    %189 = vmatpush1.msra.mxu0 %v147
    %190 = vmatprep.subr.mxu0 0.0
    %191 = vmatpush1.msra.mxu0 %v148
    %192 = vmatprep.subr.mxu0 0.0
    %193 = vmatpush1.msra.mxu0 %v149
    %194 = vmatprep.subr.mxu0 0.0
    %195 = vmatpush1.msra.mxu0 %v150
    %196 = vmatprep.subr.mxu0 0.0
    %197 = vmatpush1.msra.mxu0 %v151
    %198 = vmatprep.subr.mxu0 0.0
    %199 = vmatpush1.msra.mxu0 %v152
    %200 = vmatprep.subr.mxu0 0.0
    %201 = vmatpush1.msra.mxu0 %v153
    %202 = vmatprep.subr.mxu0 0.0
    %203 = vmatpush1.msra.mxu0 %v154
    %204 = vmatprep.subr.mxu0 0.0
    %205 = vmatpush1.msra.mxu0 %v155
    %206 = vmatprep.subr.mxu0 0.0
    %207 = vmatpush1.msra.mxu0 %v156
    %208 = vmatprep.subr.mxu0 0.0
    %209 = vmatpush1.msra.mxu0 %v157
    %210 = vmatprep.subr.mxu0 0.0
    %211 = vmatpush1.msra.mxu0 %v158
    %212 = vmatprep.subr.mxu0 0.0
    %213 = vmatpush1.msra.mxu0 %v159
    %214 = vmatprep.subr.mxu0 0.0
    %215 = vmatpush1.msra.mxu0 %v160
    %216 = vmatprep.subr.mxu0 0.0
    %217 = vmatpush1.msra.mxu0 %v161
    %218 = vmatprep.subr.mxu0 0.0
    %219 = vmatpush1.msra.mxu0 %v162
    %220 = vmatprep.subr.mxu0 0.0
    %221 = vmatpush1.msra.mxu0 %v163
    %222 = vmatprep.subr.mxu0 0.0
    %223 = vmatpush1.msra.mxu0 %v164
    %224 = vmatprep.subr.mxu0 0.0
    %225 = vmatpush1.msra.mxu0 %v165
    %226 = vmatprep.subr.mxu0 0.0
    %227 = vmatpush1.msra.mxu0 %v166
    %228 = vmatprep.subr.mxu0 0.0
    %229 = vmatpush1.msra.mxu0 %v167
    %230 = vmatprep.subr.mxu0 0.0
    %231 = vmatpush1.msra.mxu0 %v168
    %232 = vmatprep.subr.mxu0 0.0
    %233 = vmatpush1.msra.mxu0 %v169
    %234 = vmatprep.subr.mxu0 0.0
    %235 = vmatpush1.msra.mxu0 %v170
    %236 = vmatprep.subr.mxu0 0.0
    %237 = vmatpush1.msra.mxu0 %v171
    %238 = vmatprep.subr.mxu0 0.0
    %239 = vmatpush1.msra.mxu0 %v172
    %240 = vmatprep.subr.mxu0 0.0
    %241 = vmatpush1.msra.mxu0 %v173
    %242 = vmatprep.subr.mxu0 0.0
    %243 = vmatpush1.msra.mxu0 %v174
    %244 = vmatprep.subr.mxu0 0.0
    %245 = vmatpush1.msra.mxu0 %v175
    %246 = vmatprep.subr.mxu0 0.0
    %247 = vmatpush1.msra.mxu0 %v176
    %248 = vmatprep.mubr.f32.mxu0 %v61
    %249 = vmatmul.mubr.f32.gmra.mrb[0].mxu0 %v137
    %v250 = vpop.f32.mrb[0].mxu0
    %v251 = vadd.f32 %v182, %v250
    %v252 = vpop.f32.mrb[0].mxu0
    %253 = vmatprep.mubr.f32.mxu0 %v62
    %254 = vmatmul.mubr.f32.gmra.mrb[0].mxu0 %v142
    %v255 = vpop.f32.mrb[0].mxu0
    %v256 = vadd.f32 %v182, %v255
    %v257 = vpop.f32.mrb[0].mxu0
    %258 = vdwg.mxu0
    %v259 = vmax.f32 %v251, 0.0
    %v260 = vmax.f32 %v256, 0.0
    %261 = vmatprep.subr.mxu0 0.0
    %262 = vmatpush1.msra.mxu0 %v259
    %263 = vmatprep.subr.mxu0 0.0
    %264 = vmatpush1.msra.mxu0 %v260
    %265 = vmatprep.subr.mxu0 0.0
    %266 = vmatpush1.msra.mxu0 0.0
    %267 = vmatprep.subr.mxu0 0.0
    %268 = vmatpush1.msra.mxu0 0.0
    %269 = vmatprep.subr.mxu0 0.0
    %270 = vmatpush1.msra.mxu0 0.0
    %271 = vmatprep.subr.mxu0 0.0
    %272 = vmatpush1.msra.mxu0 0.0
    %273 = vmatprep.subr.mxu0 0.0
    %274 = vmatpush1.msra.mxu0 0.0
    %275 = vmatprep.subr.mxu0 0.0
    %276 = vmatpush1.msra.mxu0 0.0
    %277 = vmatprep.subr.mxu0 0.0
    %278 = vmatpush1.msra.mxu0 0.0
    %279 = vmatprep.subr.mxu0 0.0
    %280 = vmatpush1.msra.mxu0 0.0
    %281 = vmatprep.subr.mxu0 0.0
    %282 = vmatpush1.msra.mxu0 0.0
    %283 = vmatprep.subr.mxu0 0.0
    %284 = vmatpush1.msra.mxu0 0.0
    %285 = vmatprep.subr.mxu0 0.0
    %286 = vmatpush1.msra.mxu0 0.0
    %287 = vmatprep.subr.mxu0 0.0
    %288 = vmatpush1.msra.mxu0 0.0
    %289 = vmatprep.subr.mxu0 0.0
    %290 = vmatpush1.msra.mxu0 0.0
    %291 = vmatprep.subr.mxu0 0.0
    %292 = vmatpush1.msra.mxu0 0.0
    %293 = vmatprep.subr.mxu0 0.0
    %294 = vmatpush1.msra.mxu0 0.0
    %295 = vmatprep.subr.mxu0 0.0
    %296 = vmatpush1.msra.mxu0 0.0
    %297 = vmatprep.subr.mxu0 0.0
    %298 = vmatpush1.msra.mxu0 0.0
    %299 = vmatprep.subr.mxu0 0.0
    %300 = vmatpush1.msra.mxu0 0.0
    %301 = vmatprep.subr.mxu0 0.0
    %302 = vmatpush1.msra.mxu0 0.0
    %303 = vmatprep.subr.mxu0 0.0
    %304 = vmatpush1.msra.mxu0 0.0
    %305 = vmatprep.subr.mxu0 0.0
    %306 = vmatpush1.msra.mxu0 0.0
    %307 = vmatprep.subr.mxu0 0.0
    %308 = vmatpush1.msra.mxu0 0.0
    %309 = vmatprep.subr.mxu0 0.0
    %310 = vmatpush1.msra.mxu0 0.0
    %311 = vmatprep.subr.mxu0 0.0
    %312 = vmatpush1.msra.mxu0 0.0
    %313 = vmatprep.subr.mxu0 0.0
    %314 = vmatpush1.msra.mxu0 0.0
    %315 = vmatprep.subr.mxu0 0.0
    %316 = vmatpush1.msra.mxu0 0.0
    %317 = vmatprep.subr.mxu0 0.0
    %318 = vmatpush1.msra.mxu0 0.0
    %319 = vmatprep.subr.mxu0 0.0
    %320 = vmatpush1.msra.mxu0 0.0
    %321 = vmatprep.subr.mxu0 0.0
    %322 = vmatpush1.msra.mxu0 0.0
    %323 = vmatprep.subr.mxu0 0.0
    %324 = vmatpush1.msra.mxu0 0.0
    %325 = vmatprep.mubr.f32.mxu0 0.0
    %326 = vmatmul.mubr.f32.gmra.mrb[0].mxu0 %v65
    %v327 = vpop.f32.mrb[0].mxu0
    %v328 = vadd.f32 0.0, %v327
    %v329 = vpop.f32.mrb[0].mxu0
    %330 = vmatprep.mubr.f32.mxu0 0.0
    %331 = vmatmul.mubr.f32.gmra.mrb[0].mxu0 %v68
    %v332 = vpop.f32.mrb[0].mxu0
    %v333 = vadd.f32 0.0, %v332
    %v334 = vpop.f32.mrb[0].mxu0
    %335 = vdwg.mxu0
    %s336 = scalar_lea.vmem [#allocation7], 256
    %v337 = vld [vmem:[%s336] sm:$0xff]
    %v338 = vld [vmem:[%s336 + $0x8] sm:$0xff]
    %v339 = vld [vmem:[%s336 + $0x10] sm:$0xff]
    %v340 = vld [vmem:[%s336 + $0x18] sm:$0xff]
    %v341 = vld [vmem:[%s336 + $0x20] sm:$0xff]
    %v342 = vld [vmem:[%s336 + $0x28] sm:$0xff]
    %v343 = vld [vmem:[%s336 + $0x30] sm:$0xff]
    %v344 = vld [vmem:[%s336 + $0x38] sm:$0xff]
    %v345 = vld [vmem:[%s336 + $0x40] sm:$0xff]
    %v346 = vld [vmem:[%s336 + $0x48] sm:$0xff]
    %v347 = vld [vmem:[%s336 + $0x50] sm:$0xff]
    %v348 = vld [vmem:[%s336 + $0x58] sm:$0xff]
    %v349 = vld [vmem:[%s336 + $0x60] sm:$0xff]
    %v350 = vld [vmem:[%s336 + $0x68] sm:$0xff]
    %v351 = vld [vmem:[%s336 + $0x70] sm:$0xff]
    %v352 = vld [vmem:[%s336 + $0x78] sm:$0xff]
    %v353 = vld [vmem:[%s336 + $0x80] sm:$0xff]
    %v354 = vld [vmem:[%s336 + $0x88] sm:$0xff]
    %v355 = vld [vmem:[%s336 + $0x90] sm:$0xff]
    %v356 = vld [vmem:[%s336 + $0x98] sm:$0xff]
    %v357 = vld [vmem:[%s336 + $0xa0] sm:$0xff]
    %v358 = vld [vmem:[%s336 + $0xa8] sm:$0xff]
    %v359 = vld [vmem:[%s336 + $0xb0] sm:$0xff]
    %v360 = vld [vmem:[%s336 + $0xb8] sm:$0xff]
    %v361 = vld [vmem:[%s336 + $0xc0] sm:$0xff]
    %v362 = vld [vmem:[%s336 + $0xc8] sm:$0xff]
    %v363 = vld [vmem:[%s336 + $0xd0] sm:$0xff]
    %v364 = vld [vmem:[%s336 + $0xd8] sm:$0xff]
    %v365 = vld [vmem:[%s336 + $0xe0] sm:$0xff]
    %v366 = vld [vmem:[%s336 + $0xe8] sm:$0xff]
    %v367 = vld [vmem:[%s336 + $0xf0] sm:$0xff]
    %v368 = vld [vmem:[%s336 + $0xf8] sm:$0xff]
    %s369 = scalar_lea.vmem %s3, 1
    %v370 = vld [vmem:[%s369] sm:$0x1]
    %v372 = vlaneseq
    %v373 = vshrl.u32 %v372, 7
    %v374 = vsub.s32 0, %v373
    %v375 = vrot.slane %v370, %v374
    %377 = vmatprep.subr.mxu0 0.0
    %378 = vmatpush1.msra.mxu0 %v337
    %379 = vmatprep.subr.mxu0 0.0
    %380 = vmatpush1.msra.mxu0 %v338
    %381 = vmatprep.subr.mxu0 0.0
    %382 = vmatpush1.msra.mxu0 %v339
    %383 = vmatprep.subr.mxu0 0.0
    %384 = vmatpush1.msra.mxu0 %v340
    %385 = vmatprep.subr.mxu0 0.0
    %386 = vmatpush1.msra.mxu0 %v341
    %387 = vmatprep.subr.mxu0 0.0
    %388 = vmatpush1.msra.mxu0 %v342
    %389 = vmatprep.subr.mxu0 0.0
    %390 = vmatpush1.msra.mxu0 %v343
    %391 = vmatprep.subr.mxu0 0.0
    %392 = vmatpush1.msra.mxu0 %v344
    %393 = vmatprep.subr.mxu0 0.0
    %394 = vmatpush1.msra.mxu0 %v345
    %395 = vmatprep.subr.mxu0 0.0
    %396 = vmatpush1.msra.mxu0 %v346
    %397 = vmatprep.subr.mxu0 0.0
    %398 = vmatpush1.msra.mxu0 %v347
    %399 = vmatprep.subr.mxu0 0.0
    %400 = vmatpush1.msra.mxu0 %v348
    %401 = vmatprep.subr.mxu0 0.0
    %402 = vmatpush1.msra.mxu0 %v349
    %403 = vmatprep.subr.mxu0 0.0
    %404 = vmatpush1.msra.mxu0 %v350
    %405 = vmatprep.subr.mxu0 0.0
    %406 = vmatpush1.msra.mxu0 %v351
    %407 = vmatprep.subr.mxu0 0.0
    %408 = vmatpush1.msra.mxu0 %v352
    %409 = vmatprep.subr.mxu0 0.0
    %410 = vmatpush1.msra.mxu0 %v353
    %411 = vmatprep.subr.mxu0 0.0
    %412 = vmatpush1.msra.mxu0 %v354
    %413 = vmatprep.subr.mxu0 0.0
    %414 = vmatpush1.msra.mxu0 %v355
    %415 = vmatprep.subr.mxu0 0.0
    %416 = vmatpush1.msra.mxu0 %v356
    %417 = vmatprep.subr.mxu0 0.0
    %418 = vmatpush1.msra.mxu0 %v357
    %419 = vmatprep.subr.mxu0 0.0
    %420 = vmatpush1.msra.mxu0 %v358
    %421 = vmatprep.subr.mxu0 0.0
    %422 = vmatpush1.msra.mxu0 %v359
    %423 = vmatprep.subr.mxu0 0.0
    %424 = vmatpush1.msra.mxu0 %v360
    %425 = vmatprep.subr.mxu0 0.0
    %426 = vmatpush1.msra.mxu0 %v361
    %427 = vmatprep.subr.mxu0 0.0
    %428 = vmatpush1.msra.mxu0 %v362
    %429 = vmatprep.subr.mxu0 0.0
    %430 = vmatpush1.msra.mxu0 %v363
    %431 = vmatprep.subr.mxu0 0.0
    %432 = vmatpush1.msra.mxu0 %v364
    %433 = vmatprep.subr.mxu0 0.0
    %434 = vmatpush1.msra.mxu0 %v365
    %435 = vmatprep.subr.mxu0 0.0
    %436 = vmatpush1.msra.mxu0 %v366
    %437 = vmatprep.subr.mxu0 0.0
    %438 = vmatpush1.msra.mxu0 %v367
    %439 = vmatprep.subr.mxu0 0.0
    %440 = vmatpush1.msra.mxu0 %v368
    %441 = vmatprep.mubr.f32.mxu0 %v259
    %442 = vmatmul.mubr.f32.gmra.mrb[0].mxu0 %v328
    %v443 = vpop.f32.mrb[0].mxu0
    %v444 = vadd.f32 %v375, %v443
    %v445 = vpop.f32.mrb[0].mxu0
    %446 = vmatprep.mubr.f32.mxu0 %v260
    %447 = vmatmul.mubr.f32.gmra.mrb[0].mxu0 %v333
    %v448 = vpop.f32.mrb[0].mxu0
    %v449 = vadd.f32 %v375, %v448
    %v450 = vpop.f32.mrb[0].mxu0
    %451 = vdwg.mxu0
    %v452 = vmax.f32 %v444, 0.0
    %v453 = vmax.f32 %v449, 0.0
    %454 = vmatprep.subr.mxu0 0.0
    %455 = vmatpush1.msra.mxu0 %v452
    %456 = vmatprep.subr.mxu0 0.0
    %457 = vmatpush1.msra.mxu0 %v453
    %458 = vmatprep.subr.mxu0 0.0
    %459 = vmatpush1.msra.mxu0 0.0
    %460 = vmatprep.subr.mxu0 0.0
    %461 = vmatpush1.msra.mxu0 0.0
    %462 = vmatprep.subr.mxu0 0.0
    %463 = vmatpush1.msra.mxu0 0.0
    %464 = vmatprep.subr.mxu0 0.0
    %465 = vmatpush1.msra.mxu0 0.0
    %466 = vmatprep.subr.mxu0 0.0
    %467 = vmatpush1.msra.mxu0 0.0
    %468 = vmatprep.subr.mxu0 0.0
    %469 = vmatpush1.msra.mxu0 0.0
    %470 = vmatprep.subr.mxu0 0.0
    %471 = vmatpush1.msra.mxu0 0.0
    %472 = vmatprep.subr.mxu0 0.0
    %473 = vmatpush1.msra.mxu0 0.0
    %474 = vmatprep.subr.mxu0 0.0
    %475 = vmatpush1.msra.mxu0 0.0
    %476 = vmatprep.subr.mxu0 0.0
    %477 = vmatpush1.msra.mxu0 0.0
    %478 = vmatprep.subr.mxu0 0.0
    %479 = vmatpush1.msra.mxu0 0.0
    %480 = vmatprep.subr.mxu0 0.0
    %481 = vmatpush1.msra.mxu0 0.0
    %482 = vmatprep.subr.mxu0 0.0
    %483 = vmatpush1.msra.mxu0 0.0
    %484 = vmatprep.subr.mxu0 0.0
    %485 = vmatpush1.msra.mxu0 0.0
    %486 = vmatprep.subr.mxu0 0.0
    %487 = vmatpush1.msra.mxu0 0.0
    %488 = vmatprep.subr.mxu0 0.0
    %489 = vmatpush1.msra.mxu0 0.0
    %490 = vmatprep.subr.mxu0 0.0
    %491 = vmatpush1.msra.mxu0 0.0
    %492 = vmatprep.subr.mxu0 0.0
    %493 = vmatpush1.msra.mxu0 0.0
    %494 = vmatprep.subr.mxu0 0.0
    %495 = vmatpush1.msra.mxu0 0.0
    %496 = vmatprep.subr.mxu0 0.0
    %497 = vmatpush1.msra.mxu0 0.0
    %498 = vmatprep.subr.mxu0 0.0
    %499 = vmatpush1.msra.mxu0 0.0
    %500 = vmatprep.subr.mxu0 0.0
    %501 = vmatpush1.msra.mxu0 0.0
    %502 = vmatprep.subr.mxu0 0.0
    %503 = vmatpush1.msra.mxu0 0.0
    %504 = vmatprep.subr.mxu0 0.0
    %505 = vmatpush1.msra.mxu0 0.0
    %506 = vmatprep.subr.mxu0 0.0
    %507 = vmatpush1.msra.mxu0 0.0
    %508 = vmatprep.subr.mxu0 0.0
    %509 = vmatpush1.msra.mxu0 0.0
    %510 = vmatprep.subr.mxu0 0.0
    %511 = vmatpush1.msra.mxu0 0.0
    %512 = vmatprep.subr.mxu0 0.0
    %513 = vmatpush1.msra.mxu0 0.0
    %514 = vmatprep.subr.mxu0 0.0
    %515 = vmatpush1.msra.mxu0 0.0
    %516 = vmatprep.subr.mxu0 0.0
    %517 = vmatpush1.msra.mxu0 0.0
    %518 = vmatprep.mubr.f32.mxu0 0.0
    %519 = vmatmul.mubr.f32.gmra.mrb[0].mxu0 %v65
    %v520 = vpop.f32.mrb[0].mxu0
    %v521 = vadd.f32 0.0, %v520
    %v522 = vpop.f32.mrb[0].mxu0
    %523 = vmatprep.mubr.f32.mxu0 0.0
    %524 = vmatmul.mubr.f32.gmra.mrb[0].mxu0 %v68
    %v525 = vpop.f32.mrb[0].mxu0
    %v526 = vadd.f32 0.0, %v525
    %v527 = vpop.f32.mrb[0].mxu0
    %528 = vdwg.mxu0
    %s529 = scalar_lea.vmem [#allocation7], 512
    %v530 = vld [vmem:[%s529] sm:$0xff]
    %v531 = vld [vmem:[%s529 + $0x8] sm:$0xff]
    %v532 = vld [vmem:[%s529 + $0x10] sm:$0xff]
    %v533 = vld [vmem:[%s529 + $0x18] sm:$0xff]
    %v534 = vld [vmem:[%s529 + $0x20] sm:$0xff]
    %v535 = vld [vmem:[%s529 + $0x28] sm:$0xff]
    %v536 = vld [vmem:[%s529 + $0x30] sm:$0xff]
    %v537 = vld [vmem:[%s529 + $0x38] sm:$0xff]
    %v538 = vld [vmem:[%s529 + $0x40] sm:$0xff]
    %v539 = vld [vmem:[%s529 + $0x48] sm:$0xff]
    %v540 = vld [vmem:[%s529 + $0x50] sm:$0xff]
    %v541 = vld [vmem:[%s529 + $0x58] sm:$0xff]
    %v542 = vld [vmem:[%s529 + $0x60] sm:$0xff]
    %v543 = vld [vmem:[%s529 + $0x68] sm:$0xff]
    %v544 = vld [vmem:[%s529 + $0x70] sm:$0xff]
    %v545 = vld [vmem:[%s529 + $0x78] sm:$0xff]
    %v546 = vld [vmem:[%s529 + $0x80] sm:$0xff]
    %v547 = vld [vmem:[%s529 + $0x88] sm:$0xff]
    %v548 = vld [vmem:[%s529 + $0x90] sm:$0xff]
    %v549 = vld [vmem:[%s529 + $0x98] sm:$0xff]
    %v550 = vld [vmem:[%s529 + $0xa0] sm:$0xff]
    %v551 = vld [vmem:[%s529 + $0xa8] sm:$0xff]
    %v552 = vld [vmem:[%s529 + $0xb0] sm:$0xff]
    %v553 = vld [vmem:[%s529 + $0xb8] sm:$0xff]
    %v554 = vld [vmem:[%s529 + $0xc0] sm:$0xff]
    %v555 = vld [vmem:[%s529 + $0xc8] sm:$0xff]
    %v556 = vld [vmem:[%s529 + $0xd0] sm:$0xff]
    %v557 = vld [vmem:[%s529 + $0xd8] sm:$0xff]
    %v558 = vld [vmem:[%s529 + $0xe0] sm:$0xff]
    %v559 = vld [vmem:[%s529 + $0xe8] sm:$0xff]
    %v560 = vld [vmem:[%s529 + $0xf0] sm:$0xff]
    %v561 = vld [vmem:[%s529 + $0xf8] sm:$0xff]
    %s562 = scalar_lea.vmem %s3, 2
    %v563 = vld [vmem:[%s562] sm:$0x1]
    %v565 = vlaneseq
    %v566 = vshrl.u32 %v565, 7
    %v567 = vsub.s32 0, %v566
    %v568 = vrot.slane %v563, %v567
    %570 = vmatprep.subr.mxu0 0.0
    %571 = vmatpush1.msra.mxu0 %v530
    %572 = vmatprep.subr.mxu0 0.0
    %573 = vmatpush1.msra.mxu0 %v531
    %574 = vmatprep.subr.mxu0 0.0
    %575 = vmatpush1.msra.mxu0 %v532
    %576 = vmatprep.subr.mxu0 0.0
    %577 = vmatpush1.msra.mxu0 %v533
    %578 = vmatprep.subr.mxu0 0.0
    %579 = vmatpush1.msra.mxu0 %v534
    %580 = vmatprep.subr.mxu0 0.0
    %581 = vmatpush1.msra.mxu0 %v535
    %582 = vmatprep.subr.mxu0 0.0
    %583 = vmatpush1.msra.mxu0 %v536
    %584 = vmatprep.subr.mxu0 0.0
    %585 = vmatpush1.msra.mxu0 %v537
    %586 = vmatprep.subr.mxu0 0.0
    %587 = vmatpush1.msra.mxu0 %v538
    %588 = vmatprep.subr.mxu0 0.0
    %589 = vmatpush1.msra.mxu0 %v539
    %590 = vmatprep.subr.mxu0 0.0
    %591 = vmatpush1.msra.mxu0 %v540
    %592 = vmatprep.subr.mxu0 0.0
    %593 = vmatpush1.msra.mxu0 %v541
    %594 = vmatprep.subr.mxu0 0.0
    %595 = vmatpush1.msra.mxu0 %v542
    %596 = vmatprep.subr.mxu0 0.0
    %597 = vmatpush1.msra.mxu0 %v543
    %598 = vmatprep.subr.mxu0 0.0
    %599 = vmatpush1.msra.mxu0 %v544
    %600 = vmatprep.subr.mxu0 0.0
    %601 = vmatpush1.msra.mxu0 %v545
    %602 = vmatprep.subr.mxu0 0.0
    %603 = vmatpush1.msra.mxu0 %v546
    %604 = vmatprep.subr.mxu0 0.0
    %605 = vmatpush1.msra.mxu0 %v547
    %606 = vmatprep.subr.mxu0 0.0
    %607 = vmatpush1.msra.mxu0 %v548
    %608 = vmatprep.subr.mxu0 0.0
    %609 = vmatpush1.msra.mxu0 %v549
    %610 = vmatprep.subr.mxu0 0.0
    %611 = vmatpush1.msra.mxu0 %v550
    %612 = vmatprep.subr.mxu0 0.0
    %613 = vmatpush1.msra.mxu0 %v551
    %614 = vmatprep.subr.mxu0 0.0
    %615 = vmatpush1.msra.mxu0 %v552
    %616 = vmatprep.subr.mxu0 0.0
    %617 = vmatpush1.msra.mxu0 %v553
    %618 = vmatprep.subr.mxu0 0.0
    %619 = vmatpush1.msra.mxu0 %v554
    %620 = vmatprep.subr.mxu0 0.0
    %621 = vmatpush1.msra.mxu0 %v555
    %622 = vmatprep.subr.mxu0 0.0
    %623 = vmatpush1.msra.mxu0 %v556
    %624 = vmatprep.subr.mxu0 0.0
    %625 = vmatpush1.msra.mxu0 %v557
    %626 = vmatprep.subr.mxu0 0.0
    %627 = vmatpush1.msra.mxu0 %v558
    %628 = vmatprep.subr.mxu0 0.0
    %629 = vmatpush1.msra.mxu0 %v559
    %630 = vmatprep.subr.mxu0 0.0
    %631 = vmatpush1.msra.mxu0 %v560
    %632 = vmatprep.subr.mxu0 0.0
    %633 = vmatpush1.msra.mxu0 %v561
    %634 = vmatprep.mubr.f32.mxu0 %v452
    %635 = vmatmul.mubr.f32.gmra.mrb[0].mxu0 %v521
    %v636 = vpop.f32.mrb[0].mxu0
    %v637 = vadd.f32 %v568, %v636
    %v638 = vpop.f32.mrb[0].mxu0
    %639 = vmatprep.mubr.f32.mxu0 %v453
    %640 = vmatmul.mubr.f32.gmra.mrb[0].mxu0 %v526
    %v641 = vpop.f32.mrb[0].mxu0
    %v642 = vadd.f32 %v568, %v641
    %v643 = vpop.f32.mrb[0].mxu0
    %644 = vdwg.mxu0
    %645 = vst [vmem:[#allocation8] sm:$0xff] %v637
    %646 = vst [vmem:[#allocation8 + $0x8] sm:$0xff] %v642
    // Predicated region
    $region30: #{gnn_forward_fused.1} parent=1 // pred_check
      _
    $region31: #{gnn_forward_fused.1} parent=1 // pred_check_branch
      %648 = sbr.rel (0) target = $region33
    $region32: #{gnn_forward_fused.1} parent=1 // pred_region
      %s650 = ssub.s32 256, 256
      %651 = vsyncadd [#allocation4], %s650
      %s652 = sshll.u32 [#allocation8], 4
      %s653 = int_to_ptr.vmem [resolvable:$true] %s652
      %658 = dma.vmem_to_hbm [thread:$0]  %s653, 256, %s4, [#allocation4], 128, 128, 8
    $region33: #{gnn_forward_fused.1} parent=1 // pred_fallthru
      _
    // Predicated region
    $region34: #{gnn_forward_fused.1} parent=1 // pred_check
      _
    $region35: #{gnn_forward_fused.1} parent=1 // pred_check_branch
      %660 = sbr.rel (0) target = $region37
    $region36: #{gnn_forward_fused.1} parent=1 // pred_region
      %661 = dma.done [#allocation4], 256
    $region37: #{gnn_forward_fused.1} parent=1 // pred_fallthru
      _
    %662 = vsyncpa [#allocation3], 1
    %663 = vsyncpa [#allocation6], 1
    %664 = vsyncpa [#allocation4], 1

</llo_original>
